<compile_context>
chip_gen: v7x
topology: tpu7x:2x2x1
jax: 0.10.0
libtpu: 0.0.40
codegen_flags: <defaults>
</compile_context>

<pallas_src>
import jax
import jax.numpy as jnp
import numpy as np
from jax.experimental import pallas as pl
from jax.experimental.pallas import tpu as pltpu


LANE = 128


# ---------------------------------------------------------------------------
# Small helpers
# ---------------------------------------------------------------------------
def _round_up(a, b):
    return ((a + b - 1) // b) * b


def _pad2(a, rows, cols):
    r, c = a.shape
    return jnp.pad(a, ((0, rows - r), (0, cols - c)))


def _vmem_budget_bytes():
    """Per-generation scoped-VMEM budget (<= ~85% of physical, capped at 112 MiB)."""
    cap = 64 * 1024 * 1024  # conservative fallback (v7x physical)
    try:
        info = pltpu.get_tpu_info()
        cap = int(getattr(info, "vmem_capacity_bytes", cap))
    except Exception:
        pass
    return int(min(0.85 * cap, 112 * 1024 * 1024))


def _choose_tiles(n, h1p, h2p, outp, vmem_budget):
    """Pick (TM, TK, n_pad). Prefer >=2 row blocks (megacore) and resident XW."""
    n128 = _round_up(max(n, 1), LANE)
    tm = LANE
    for cand in (512, 256):
        if n128 >= 2 * cand:   # keep num_m >= 2 and padding waste low
            tm = cand
            break
    n_pad = _round_up(n, tm)

    def stage_bytes(tk):
        # Conservative: every operand double-buffered, f32 accumulator single.
        s2 = 2 * (tm * tk * 2 + tk * h1p * 2 + h1p * h2p * 2 + h1p * 4
                  + tm * h2p * 2) + tm * h1p * 4
        s3 = 2 * (tm * tk * 2 + tk * h2p * 2 + h2p * outp * 2 + h2p * 4
                  + outp * 4 + tm * outp * 2) + tm * h2p * 4
        return max(s2, s3)

    tk = LANE
    for cand in (n_pad, 512, 256, 128):
        if cand <= n_pad and n_pad % cand == 0 and stage_bytes(cand) <= 0.8 * vmem_budget:
            tk = cand
            break
    return tm, tk, n_pad


def _block_sparsity(support_np, n_pad, tm, tk):
    """Per row block, list the K-tile indices of `support` containing nonzeros."""
    num_m = n_pad // tm
    num_k = n_pad // tk
    sup = np.zeros((n_pad, n_pad), np.float32)
    sup[: support_np.shape[0], : support_np.shape[1]] = support_np
    nz = np.abs(sup).reshape(num_m, tm, num_k, tk).sum(axis=(1, 3)) > 0
    counts = np.maximum(nz.sum(axis=1), 1).astype(np.int32)   # >=1 so finalize runs
    max_nnz = int(counts.max())
    kmap = np.zeros((num_m, max_nnz), np.int32)
    for i in range(num_m):
        idx = np.nonzero(nz[i])[0]
        if idx.size == 0:
            idx = np.array([0], np.int64)
        kmap[i, : idx.size] = idx
        kmap[i, idx.size:] = idx[-1]   # repeat last index -> padding-step DMAs elided
    return jnp.asarray(kmap), jnp.asarray(counts), max_nnz


# ---------------------------------------------------------------------------
# Kernels
# ---------------------------------------------------------------------------
def embed_kernel(x_ref, w1_ref, b1_ref, wg1_ref, out_ref):
    """Stage 1: XW1 = relu(x @ W1 + B1) @ Wg1 for one row block."""
    h = jnp.dot(x_ref[...], w1_ref[...],
                preferred_element_type=jnp.float32) + b1_ref[...]
    h = jnp.maximum(h, 0.0).astype(jnp.bfloat16)
    out_ref[...] = jnp.dot(h, wg1_ref[...],
                           preferred_element_type=jnp.float32).astype(out_ref.dtype)


def gcn_agg_kernel(kmap_ref, kcnt_ref, sup_ref, xw_ref, bg_ref, wnext_ref,
                   out_ref, acc_ref):
    """GCN layer: block-sparse accumulate support @ XW over nonzero K tiles,
    then relu(+bias) fused with the next layer's feature transform."""
    i = pl.program_id(0)
    s = pl.program_id(1)
    cnt = kcnt_ref[i]

    @pl.when(s == 0)
    def _():
        acc_ref[...] = jnp.dot(sup_ref[...], xw_ref[...],
                               preferred_element_type=jnp.float32)

    @pl.when(jnp.logical_and(s > 0, s < cnt))
    def _():
        acc_ref[...] += jnp.dot(sup_ref[...], xw_ref[...],
                                preferred_element_type=jnp.float32)

    @pl.when(s == cnt - 1)
    def _():
        h = jnp.maximum(acc_ref[...] + bg_ref[...], 0.0).astype(jnp.bfloat16)
        out_ref[...] = jnp.dot(h, wnext_ref[...],
                               preferred_element_type=jnp.float32).astype(out_ref.dtype)


def gcn_final_kernel(kmap_ref, kcnt_ref, sup_ref, xw_ref, bg_ref, w2_ref, b2_ref,
                     out_ref, acc_ref):
    """Last GCN layer fused with linear2: relu(relu(agg + bg) @ W2 + B2)."""
    i = pl.program_id(0)
    s = pl.program_id(1)
    cnt = kcnt_ref[i]

    @pl.when(s == 0)
    def _():
        acc_ref[...] = jnp.dot(sup_ref[...], xw_ref[...],
                               preferred_element_type=jnp.float32)

    @pl.when(jnp.logical_and(s > 0, s < cnt))
    def _():
        acc_ref[...] += jnp.dot(sup_ref[...], xw_ref[...],
                                preferred_element_type=jnp.float32)

    @pl.when(s == cnt - 1)
    def _():
        h = jnp.maximum(acc_ref[...] + bg_ref[...], 0.0).astype(jnp.bfloat16)
        y = jnp.dot(h, w2_ref[...],
                    preferred_element_type=jnp.float32) + b2_ref[...]
        out_ref[...] = jnp.maximum(y, 0.0).astype(out_ref.dtype)


# ---------------------------------------------------------------------------
# Wrapper
# ---------------------------------------------------------------------------
def gcn_forward(x, support, params):
    """Full GCN forward via three row-tiled Pallas kernels. Returns (y, support)."""
    n, f_in = x.shape
    h0 = params["w1"].shape[1]
    h1 = params["wg1"].shape[1]
    h2 = params["wg2"].shape[1]
    out_dim = params["w2"].shape[1]

    # Lane/sublane aligned sizes (all feature dims padded to 128 lanes).
    f_pad = _round_up(f_in, LANE)
    h0p = _round_up(h0, LANE)
    h1p = _round_up(h1, LANE)
    h2p = _round_up(h2, LANE)
    outp = _round_up(out_dim, LANE)

    vmem_budget = _vmem_budget_bytes()
    tm, tk, n_pad = _choose_tiles(n, h1p, h2p, outp, vmem_budget)
    num_m = n_pad // tm

    bf = jnp.bfloat16
    # Zero-padding of support's extra rows/columns keeps genuine outputs exact.
    x_p = _pad2(x, n_pad, f_pad).astype(bf)
    sup_p = _pad2(support, n_pad, n_pad).astype(bf)

    w1 = _pad2(params["w1"], f_pad, h0p).astype(bf)
    b1 = _pad2(params["b1"], 1, h0p).astype(jnp.float32)
    wg1 = _pad2(params["wg1"], h0p, h1p).astype(bf)
    bg1 = _pad2(params["bg1"], 1, h1p).astype(jnp.float32)
    wg2 = _pad2(params["wg2"], h1p, h2p).astype(bf)
    bg2 = _pad2(params["bg2"], 1, h2p).astype(jnp.float32)
    w2 = _pad2(params["w2"], h2p, outp).astype(bf)
    b2 = _pad2(params["b2"], 1, outp).astype(jnp.float32)

    kmap, kcnt, max_nnz = _block_sparsity(np.asarray(support, np.float32),
                                          n_pad, tm, tk)

    # ---- Stage 1: XW1 = relu(x @ W1 + B1) @ Wg1 ---------------------------
    xw1 = pl.pallas_call(
        embed_kernel,
        out_shape=jax.ShapeDtypeStruct((n_pad, h1p), bf),
        grid_spec=pltpu.PrefetchScalarGridSpec(
            num_scalar_prefetch=0,
            grid=(num_m,),
            in_specs=[
                pl.BlockSpec((tm, f_pad), lambda i: (i, 0)),      # x rows
                pl.BlockSpec((f_pad, h0p), lambda i: (0, 0)),     # W1 (resident)
                pl.BlockSpec((1, h0p), lambda i: (0, 0)),         # B1 (resident)
                pl.BlockSpec((h0p, h1p), lambda i: (0, 0)),       # Wg1 (resident)
            ],
            out_specs=pl.BlockSpec((tm, h1p), lambda i: (i, 0)),
        ),
        compiler_params=pltpu.CompilerParams(
            dimension_semantics=("parallel",),
            vmem_limit_bytes=vmem_budget),
    )(x_p, w1, b1, wg1)

    # ---- Stage 2: XW2 = relu(support @ XW1 + bg1) @ Wg2 --------------------
    xw2 = pl.pallas_call(
        gcn_agg_kernel,
        out_shape=jax.ShapeDtypeStruct((n_pad, h2p), bf),
        grid_spec=pltpu.PrefetchScalarGridSpec(
            num_scalar_prefetch=2,
            grid=(num_m, max_nnz),
            in_specs=[
                pl.BlockSpec((tm, tk), lambda i, s, km, kc: (i, km[i, s])),   # support tile
                pl.BlockSpec((tk, h1p), lambda i, s, km, kc: (km[i, s], 0)),  # XW1 slab
                pl.BlockSpec((1, h1p), lambda i, s, km, kc: (0, 0)),          # bg1 (resident)
                pl.BlockSpec((h1p, h2p), lambda i, s, km, kc: (0, 0)),        # Wg2 (resident)
            ],
            out_specs=pl.BlockSpec((tm, h2p), lambda i, s, km, kc: (i, 0)),
            scratch_shapes=[pltpu.VMEM((tm, h1p), jnp.float32)],
        ),
        compiler_params=pltpu.CompilerParams(
            dimension_semantics=("parallel", "arbitrary"),
            vmem_limit_bytes=vmem_budget),
    )(kmap, kcnt, sup_p, xw1, bg1, wg2)

    # ---- Stage 3: Y = relu(relu(support @ XW2 + bg2) @ W2 + B2) ------------
    y_pad = pl.pallas_call(
        gcn_final_kernel,
        out_shape=jax.ShapeDtypeStruct((n_pad, outp), bf),
        grid_spec=pltpu.PrefetchScalarGridSpec(
            num_scalar_prefetch=2,
            grid=(num_m, max_nnz),
            in_specs=[
                pl.BlockSpec((tm, tk), lambda i, s, km, kc: (i, km[i, s])),    # support tile
                pl.BlockSpec((tk, h2p), lambda i, s, km, kc: (km[i, s], 0)),   # XW2 slab
                pl.BlockSpec((1, h2p), lambda i, s, km, kc: (0, 0)),           # bg2 (resident)
                pl.BlockSpec((h2p, outp), lambda i, s, km, kc: (0, 0)),        # W2 (resident)
                pl.BlockSpec((1, outp), lambda i, s, km, kc: (0, 0)),          # B2 (resident)
            ],
            out_specs=pl.BlockSpec((tm, outp), lambda i, s, km, kc: (i, 0)),
            scratch_shapes=[pltpu.VMEM((tm, h2p), jnp.float32)],
        ),
        compiler_params=pltpu.CompilerParams(
            dimension_semantics=("parallel", "arbitrary"),
            vmem_limit_bytes=vmem_budget),
    )(kmap, kcnt, sup_p, xw2, bg2, w2, b2)

    y = y_pad[:n, :out_dim].astype(jnp.float32)
    return y, support


# ---------------------------------------------------------------------------
# Params / reference
# ---------------------------------------------------------------------------
def init_params(key, input_dim, output_dim, hidden_dims):
    """Deterministic parameter init mirroring the PyTorch module's __init__."""
    ks = jax.random.split(key, 8)

    def glorot_uniform(k, shape):
        r = np.sqrt(6.0 / (shape[0] + shape[1]))
        return jax.random.uniform(k, shape, jnp.float32, -r, r)

    def xavier_normal(k, shape):
        std = np.sqrt(2.0 / (shape[0] + shape[1]))
        return jax.random.normal(k, shape, jnp.float32) * std

    params = {}
    params["w1"] = xavier_normal(ks[0], (input_dim, hidden_dims[0]))
    params["b1"] = (1e-4 + 1e-5 * jax.random.normal(ks[1], (hidden_dims[0],))).reshape(1, -1)
    params["wg1"] = glorot_uniform(ks[2], (hidden_dims[0], hidden_dims[1]))
    params["bg1"] = jnp.zeros((1, hidden_dims[1]), jnp.float32)
    params["wg2"] = glorot_uniform(ks[3], (hidden_dims[1], hidden_dims[2]))
    params["bg2"] = jnp.zeros((1, hidden_dims[2]), jnp.float32)
    params["w2"] = xavier_normal(ks[4], (hidden_dims[2], output_dim))
    params["b2"] = (1e-4 + 1e-5 * jax.random.normal(ks[5], (output_dim,))).reshape(1, -1)
    return params


def reference_forward(x, support, params):
    """Pure-JAX reference mirroring the kernels' bf16/f32 cast sequence."""
    bf = jnp.bfloat16
    x_b = x.astype(bf)
    sup_b = support.astype(bf)
    w1 = params["w1"].astype(bf)
    wg1 = params["wg1"].astype(bf)
    wg2 = params["wg2"].astype(bf)
    w2 = params["w2"].astype(bf)

    h = jnp.maximum(jnp.dot(x_b, w1, preferred_element_type=jnp.float32)
                    + params["b1"], 0.0).astype(bf)
    xw1 = jnp.dot(h, wg1, preferred_element_type=jnp.float32).astype(bf)
    h = jnp.maximum(jnp.dot(sup_b, xw1, preferred_element_type=jnp.float32)
                    + params["bg1"], 0.0).astype(bf)
    xw2 = jnp.dot(h, wg2, preferred_element_type=jnp.float32).astype(bf)
    h = jnp.maximum(jnp.dot(sup_b, xw2, preferred_element_type=jnp.float32)
                    + params["bg2"], 0.0).astype(bf)
    y = jnp.dot(h, w2, preferred_element_type=jnp.float32) + params["b2"]
    return jnp.maximum(y, 0.0)


if __name__ == "__main__":
    # Small shapes consistent with the module: N graph nodes, feature dim,
    # hidden_dims=[256,128,64] (module default), small output dim.
    N = 16
    INPUT_DIM = 32
    OUTPUT_DIM = 16
    HIDDEN = [256, 128, 64]

    key = jax.random.PRNGKey(0)
    kx, ka, kp = jax.random.split(key, 3)

    x = jax.random.normal(kx, (N, INPUT_DIM), jnp.float32)
    # dense "support" (normalized adjacency-like matrix)
    adj = jax.random.uniform(ka, (N, N), jnp.float32)
    adj = (adj > 0.7).astype(jnp.float32) + jnp.eye(N, dtype=jnp.float32)
    deg = jnp.sum(adj, axis=1, keepdims=True)
    support = adj / deg

    params = init_params(kp, INPUT_DIM, OUTPUT_DIM, HIDDEN)

    y, sup_out = gcn_forward(x, support, params)
    y = jax.block_until_ready(y)

    y_ref = reference_forward(x, support, params)
    np.testing.assert_allclose(np.asarray(y), np.asarray(y_ref),
                               rtol=1e-2, atol=1e-2)

    print("KERNEL_OK")
</pallas_src>

<mosaic_0001>
module attributes {stable_mosaic.version = 11 : i64} {
  func.func @embed_kernel(%arg0: i32, %arg1: memref<128x128xbf16, #tpu.memory_space<vmem>>, %arg2: memref<128x256xbf16, #tpu.memory_space<vmem>>, %arg3: memref<1x256xf32, #tpu.memory_space<vmem>>, %arg4: memref<256x128xbf16, #tpu.memory_space<vmem>>, %arg5: memref<128x128xbf16, #tpu.memory_space<vmem>>) attributes {dimension_semantics = [#tpu.dimension_semantics<parallel>], iteration_bounds = array<i64: 1>, scalar_prefetch = 0 : i64, scratch_operands = 0 : i64, tpu.core_type = #tpu.core_type<tc>, window_params = [{transform_indices = @transform_0, window_bounds = array<i64: 128, 128>}, {pipeline_mode = #tpu.pipeline_mode<synchronous>, transform_indices = @transform_1, window_bounds = array<i64: 128, 256>}, {pipeline_mode = #tpu.pipeline_mode<synchronous>, transform_indices = @transform_2, window_bounds = array<i64: 1, 256>}, {pipeline_mode = #tpu.pipeline_mode<synchronous>, transform_indices = @transform_3, window_bounds = array<i64: 256, 128>}, {transform_indices = @transform_4, window_bounds = array<i64: 128, 128>}]} {
    %c0 = arith.constant 0 : index
    %c0_0 = arith.constant 0 : index
    %0 = vector.load %arg1[%c0, %c0_0] : memref<128x128xbf16, #tpu.memory_space<vmem>>, vector<128x128xbf16>
    %c0_1 = arith.constant 0 : index
    %c0_2 = arith.constant 0 : index
    %1 = vector.load %arg2[%c0_1, %c0_2] : memref<128x256xbf16, #tpu.memory_space<vmem>>, vector<128x256xbf16>
    %cst = arith.constant dense<0.000000e+00> : vector<128x256xf32>
    %2 = tpu.matmul %0, %1, %cst {dimension_numbers = #tpu.dot_dimension_numbers<[1], [0], [0], [1], [0, 0, 1, 1], [], []>} : vector<128x128xbf16>, vector<128x256xbf16>, vector<128x256xf32> -> vector<128x256xf32>
    %c0_3 = arith.constant 0 : index
    %c0_4 = arith.constant 0 : index
    %3 = vector.load %arg3[%c0_3, %c0_4] : memref<1x256xf32, #tpu.memory_space<vmem>>, vector<1x256xf32>
    %4 = vector.broadcast %3 : vector<1x256xf32> to vector<128x256xf32>
    %5 = arith.addf %2, %4 : vector<128x256xf32>
    %cst_5 = arith.constant 0.000000e+00 : f32
    %6 = vector.broadcast %cst_5 : f32 to vector<128x256xf32>
    %7 = arith.maximumf %5, %6 : vector<128x256xf32>
    %8 = arith.truncf %7 : vector<128x256xf32> to vector<128x256xbf16>
    %c0_6 = arith.constant 0 : index
    %c0_7 = arith.constant 0 : index
    %9 = vector.load %arg4[%c0_6, %c0_7] : memref<256x128xbf16, #tpu.memory_space<vmem>>, vector<256x128xbf16>
    %cst_8 = arith.constant dense<0.000000e+00> : vector<128x128xf32>
    %10 = tpu.matmul %8, %9, %cst_8 {dimension_numbers = #tpu.dot_dimension_numbers<[1], [0], [0], [1], [0, 0, 1, 1], [], []>} : vector<128x256xbf16>, vector<256x128xbf16>, vector<128x128xf32> -> vector<128x128xf32>
    %11 = arith.truncf %10 : vector<128x128xf32> to vector<128x128xbf16>
    %c0_9 = arith.constant 0 : index
    %c0_10 = arith.constant 0 : index
    %12 = vector.load %arg5[%c0_9, %c0_10] : memref<128x128xbf16, #tpu.memory_space<vmem>>, vector<128x128xbf16>
    tpu.vector_store %arg5[%c0_9, %c0_10], %11 {strides = array<i32>} : memref<128x128xbf16, #tpu.memory_space<vmem>>, vector<128x128xbf16>,
    return
  }
  func.func @transform_0(%arg0: i32) -> (i32, i32) {
    %c0_i32 = arith.constant 0 : i32
    %c0_i32_0 = arith.constant 0 : i32
    return %arg0, %c0_i32 : i32, i32
  }
  func.func @transform_1(%arg0: i32) -> (i32, i32) {
    %c0_i32 = arith.constant 0 : i32
    %c0_i32_0 = arith.constant 0 : i32
    %c0_i32_1 = arith.constant 0 : i32
    return %c0_i32, %c0_i32_0 : i32, i32
  }
  func.func @transform_2(%arg0: i32) -> (i32, i32) {
    %c0_i32 = arith.constant 0 : i32
    %c0_i32_0 = arith.constant 0 : i32
    %c0_i32_1 = arith.constant 0 : i32
    return %c0_i32, %c0_i32_0 : i32, i32
  }
  func.func @transform_3(%arg0: i32) -> (i32, i32) {
    %c0_i32 = arith.constant 0 : i32
    %c0_i32_0 = arith.constant 0 : i32
    %c0_i32_1 = arith.constant 0 : i32
    return %c0_i32, %c0_i32_0 : i32, i32
  }
  func.func @transform_4(%arg0: i32) -> (i32, i32) {
    %c0_i32 = arith.constant 0 : i32
    %c0_i32_0 = arith.constant 0 : i32
    return %arg0, %c0_i32 : i32, i32
  }
}

</mosaic_0001>

<llo_original>
// kernel: tpu_custom_call.1
$region0: #{tpu_custom_call.1}
  #allocation0 [shape = 'u32[]', space=smem, size = 0x4, offset = 0x4, fixed_abs, tag = 'smem constant byte address 0x4 - core index']
  #allocation1 [shape = 'u32[144,128]{1,0:T(1,128)}', space=vmem, size = 0x12000, scoped, tag = 'internal scratch']
  %s0 = inlined_call_operand.hbm [shape: bf16[128,128], index: 0, kind: input, shape index: {}]
  %s1 = inlined_call_operand.hbm [shape: bf16[128,256], index: 1, kind: input, shape index: {}]
  %s2 = inlined_call_operand.vmem [shape: f32[1,256], index: 2, kind: input, shape index: {}]
  %s3 = inlined_call_operand.hbm [shape: bf16[256,128], index: 3, kind: input, shape index: {}]
  %s4 = inlined_call_operand.hbm [shape: bf16[128,128], index: 4, kind: output, shape index: {}]
  %s5 = sld [smem:[#allocation0]]
  $region38: #{tpu_custom_call.1} parent=0
    _
  %s7 = ssub.s32 1, %s5
  %s8 = scalar_select 0, %s7, %s5
  $region1: #{tpu_custom_call.1} parent=0
    #allocation2 [shape = 'u8[32768]{0}', space=vmem, size = 0x8000, scoped, tag = 'input window, operand 0, single buffered']
    #allocation3 [shape = 's32[1]{0}', space=sflag, size = 0x4, scoped, tag = 'scoped memory for tpu_custom_call.1']
    #allocation4 [shape = 's32[1]{0}', space=sflag, size = 0x4, scoped, tag = 'scoped memory for tpu_custom_call.1']
    #allocation5 [shape = 'u8[65536]{0}', space=vmem, size = 0x10000, scoped, tag = 'input window, operand 1, single buffered']
    #allocation6 [shape = 's32[1]{0}', space=sflag, size = 0x4, scoped, tag = 'scoped memory for tpu_custom_call.1']
    #allocation7 [shape = 'u8[65536]{0}', space=vmem, size = 0x10000, scoped, tag = 'input window, operand 3, single buffered']
    #allocation8 [shape = 'u8[32768]{0}', space=vmem, size = 0x8000, scoped, tag = 'output window, operand 0, single buffered']
    %9 = vsyncpa [#allocation3], 0
    %10 = vsyncpa [#allocation6], 0
    %11 = vsyncpa [#allocation4], 0
    // Predicated region
    $region2: #{tpu_custom_call.1} parent=1 // pred_check
      _
    $region3: #{tpu_custom_call.1} parent=1 // pred_check_branch
      %13 = sbr.rel (0) target = $region5
    $region4: #{tpu_custom_call.1} parent=1 // pred_region
      %s15 = ssub.s32 1024, 1024
      %16 = vsyncadd [#allocation3], %s15
      %s17 = sshll.u32 [#allocation2], 4
      %s18 = int_to_ptr.vmem [resolvable:$true] %s17
      %23 = dma.hbm_to_vmem [thread:$0]  %s0, 1024, %s18, [#allocation3], 64, 64, 4
    $region5: #{tpu_custom_call.1} parent=1 // pred_fallthru
      _
    // Predicated region
    $region6: #{tpu_custom_call.1} parent=1 // pred_check
      _
    $region7: #{tpu_custom_call.1} parent=1 // pred_check_branch
      %25 = sbr.rel (0) target = $region9
    $region8: #{tpu_custom_call.1} parent=1 // pred_region
      %s27 = ssub.s32 2048, 2048
      %28 = vsyncadd [#allocation6], %s27
      %s29 = sshll.u32 [#allocation5], 4
      %s30 = int_to_ptr.vmem [resolvable:$true] %s29
      %35 = dma.hbm_to_vmem [thread:$0]  %s1, 2048, %s30, [#allocation6], 128, 128, 8
    $region9: #{tpu_custom_call.1} parent=1 // pred_fallthru
      _
    // Predicated region
    $region10: #{tpu_custom_call.1} parent=1 // pred_check
      _
    $region11: #{tpu_custom_call.1} parent=1 // pred_check_branch
      %37 = sbr.rel (0) target = $region13
    $region12: #{tpu_custom_call.1} parent=1 // pred_region
      _
    $region13: #{tpu_custom_call.1} parent=1 // pred_fallthru
      _
    // Predicated region
    $region14: #{tpu_custom_call.1} parent=1 // pred_check
      _
    $region15: #{tpu_custom_call.1} parent=1 // pred_check_branch
      %39 = sbr.rel (0) target = $region17
    $region16: #{tpu_custom_call.1} parent=1 // pred_region
      %s41 = ssub.s32 2048, 2048
      %42 = vsyncadd [#allocation6], %s41
      %s43 = sshll.u32 [#allocation7], 4
      %s44 = int_to_ptr.vmem [resolvable:$true] %s43
      %49 = dma.hbm_to_vmem [thread:$0]  %s3, 2048, %s44, [#allocation6], 64, 64, 4
    $region17: #{tpu_custom_call.1} parent=1 // pred_fallthru
      _
    // Predicated region
    $region18: #{tpu_custom_call.1} parent=1 // pred_check
      _
    $region19: #{tpu_custom_call.1} parent=1 // pred_check_branch
      %51 = sbr.rel (0) target = $region21
    $region20: #{tpu_custom_call.1} parent=1 // pred_region
      %52 = dma.done [#allocation3], 1024
    $region21: #{tpu_custom_call.1} parent=1 // pred_fallthru
      _
    // Predicated region
    $region22: #{tpu_custom_call.1} parent=1 // pred_check
      _
    $region23: #{tpu_custom_call.1} parent=1 // pred_check_branch
      %54 = sbr.rel (0) target = $region25
    $region24: #{tpu_custom_call.1} parent=1 // pred_region
      %55 = dma.done [#allocation6], 2048
    $region25: #{tpu_custom_call.1} parent=1 // pred_fallthru
      _
    // Predicated region
    $region26: #{tpu_custom_call.1} parent=1 // pred_check
      _
    $region27: #{tpu_custom_call.1} parent=1 // pred_check_branch
      %57 = sbr.rel (0) target = $region29
    $region28: #{tpu_custom_call.1} parent=1 // pred_region
      %58 = dma.done [#allocation6], 2048
    $region29: #{tpu_custom_call.1} parent=1 // pred_fallthru
      _
    %v60 = vld [vmem:[#allocation2] sm:$0xf]
    %v61 = vld [vmem:[#allocation2 + $0x4] sm:$0xf]
    %v62 = vld [vmem:[#allocation2 + $0x8] sm:$0xf]
    %v63 = vld [vmem:[#allocation2 + $0xc] sm:$0xf]
    %v64 = vld [vmem:[#allocation2 + $0x10] sm:$0xf]
    %v65 = vld [vmem:[#allocation2 + $0x14] sm:$0xf]
    %v66 = vld [vmem:[#allocation2 + $0x18] sm:$0xf]
    %v67 = vld [vmem:[#allocation2 + $0x1c] sm:$0xf]
    %v68 = vld [vmem:[#allocation2 + $0x20] sm:$0xf]
    %v69 = vld [vmem:[#allocation2 + $0x24] sm:$0xf]
    %v70 = vld [vmem:[#allocation2 + $0x28] sm:$0xf]
    %v71 = vld [vmem:[#allocation2 + $0x2c] sm:$0xf]
    %v72 = vld [vmem:[#allocation2 + $0x30] sm:$0xf]
    %v73 = vld [vmem:[#allocation2 + $0x34] sm:$0xf]
    %v74 = vld [vmem:[#allocation2 + $0x38] sm:$0xf]
    %v75 = vld [vmem:[#allocation2 + $0x3c] sm:$0xf]
    %v76 = vld [vmem:[#allocation5] sm:$0xff]
    %v77 = vld [vmem:[#allocation5 + $0x8] sm:$0xff]
    %v78 = vld [vmem:[#allocation5 + $0x10] sm:$0xff]
    %v79 = vld [vmem:[#allocation5 + $0x18] sm:$0xff]
    %v80 = vld [vmem:[#allocation5 + $0x20] sm:$0xff]
    %v81 = vld [vmem:[#allocation5 + $0x28] sm:$0xff]
    %v82 = vld [vmem:[#allocation5 + $0x30] sm:$0xff]
    %v83 = vld [vmem:[#allocation5 + $0x38] sm:$0xff]
    %v84 = vld [vmem:[#allocation5 + $0x40] sm:$0xff]
    %v85 = vld [vmem:[#allocation5 + $0x48] sm:$0xff]
    %v86 = vld [vmem:[#allocation5 + $0x50] sm:$0xff]
    %v87 = vld [vmem:[#allocation5 + $0x58] sm:$0xff]
    %v88 = vld [vmem:[#allocation5 + $0x60] sm:$0xff]
    %v89 = vld [vmem:[#allocation5 + $0x68] sm:$0xff]
    %v90 = vld [vmem:[#allocation5 + $0x70] sm:$0xff]
    %v91 = vld [vmem:[#allocation5 + $0x78] sm:$0xff]
    %v92 = vld [vmem:[%s2] sm:$0x3]
    %v94 = vlaneseq
    %v95 = vshrl.u32 %v94, 7
    %v96 = vsub.s32 0, %v95
    %v97 = vrot.slane %v92, %v96
    %v98 = vlaneseq
    %v99 = vshrl.u32 %v98, 7
    %v100 = vsub.s32 1, %v99
    %v101 = vrot.slane %v92, %v100
    %v120 = vunpack.c.l.b16 %v60
    %v121 = vunpack.c.l.b16 %v61
    %v122 = vunpack.c.l.b16 %v62
    %v123 = vunpack.c.l.b16 %v63
    %v124 = vunpack.c.l.b16 %v64
    %v125 = vunpack.c.l.b16 %v65
    %v126 = vunpack.c.l.b16 %v66
    %v127 = vunpack.c.l.b16 %v67
    %v128 = vunpack.c.l.b16 %v68
    %v129 = vunpack.c.l.b16 %v69
    %v130 = vunpack.c.l.b16 %v70
    %v131 = vunpack.c.l.b16 %v71
    %v132 = vunpack.c.l.b16 %v72
    %v133 = vunpack.c.l.b16 %v73
    %v134 = vunpack.c.l.b16 %v74
    %v135 = vunpack.c.l.b16 %v75
    %v136 = vpack.c.b16 %v121, %v120
    %v137 = vpack.c.b16 %v123, %v122
    %v138 = vpack.c.b16 %v125, %v124
    %v139 = vpack.c.b16 %v127, %v126
    %v140 = vpack.c.b16 %v129, %v128
    %v141 = vpack.c.b16 %v131, %v130
    %v142 = vpack.c.b16 %v133, %v132
    %v143 = vpack.c.b16 %v135, %v134
    %v168 = vunpack.c.l.b16 %v76
    %v169 = vunpack.c.h.b16 %v76
    %v170 = vunpack.c.l.b16 %v77
    %v171 = vunpack.c.h.b16 %v77
    %v172 = vunpack.c.l.b16 %v78
    %v173 = vunpack.c.h.b16 %v78
    %v174 = vunpack.c.l.b16 %v79
    %v175 = vunpack.c.h.b16 %v79
    %v176 = vunpack.c.l.b16 %v80
    %v177 = vunpack.c.h.b16 %v80
    %v178 = vunpack.c.l.b16 %v81
    %v179 = vunpack.c.h.b16 %v81
    %v180 = vunpack.c.l.b16 %v82
    %v181 = vunpack.c.h.b16 %v82
    %v182 = vunpack.c.l.b16 %v83
    %v183 = vunpack.c.h.b16 %v83
    %v184 = vunpack.c.l.b16 %v84
    %v185 = vunpack.c.h.b16 %v84
    %v186 = vunpack.c.l.b16 %v85
    %v187 = vunpack.c.h.b16 %v85
    %v188 = vunpack.c.l.b16 %v86
    %v189 = vunpack.c.h.b16 %v86
    %v190 = vunpack.c.l.b16 %v87
    %v191 = vunpack.c.h.b16 %v87
    %v192 = vunpack.c.l.b16 %v88
    %v193 = vunpack.c.h.b16 %v88
    %v194 = vunpack.c.l.b16 %v89
    %v195 = vunpack.c.h.b16 %v89
    %v196 = vunpack.c.l.b16 %v90
    %v197 = vunpack.c.h.b16 %v90
    %v198 = vunpack.c.l.b16 %v91
    %v199 = vunpack.c.h.b16 %v91
    %v200 = vpack.c.b16 %v170, %v168
    %v201 = vpack.c.b16 %v171, %v169
    %v202 = vpack.c.b16 %v174, %v172
    %v203 = vpack.c.b16 %v175, %v173
    %v204 = vpack.c.b16 %v178, %v176
    %v205 = vpack.c.b16 %v179, %v177
    %v206 = vpack.c.b16 %v182, %v180
    %v207 = vpack.c.b16 %v183, %v181
    %v208 = vpack.c.b16 %v186, %v184
    %v209 = vpack.c.b16 %v187, %v185
    %v210 = vpack.c.b16 %v190, %v188
    %v211 = vpack.c.b16 %v191, %v189
    %v212 = vpack.c.b16 %v194, %v192
    %v213 = vpack.c.b16 %v195, %v193
    %v214 = vpack.c.b16 %v198, %v196
    %v215 = vpack.c.b16 %v199, %v197
    %232 = vmatprep.subr.bf16.mxu0 %v201
    %233 = vmatpush1.bf16.msra.mxu0 %v200
    %234 = vmatprep.subr.bf16.mxu0 %v203
    %235 = vmatpush1.bf16.msra.mxu0 %v202
    %236 = vmatprep.subr.bf16.mxu0 %v205
    %237 = vmatpush1.bf16.msra.mxu0 %v204
    %238 = vmatprep.subr.bf16.mxu0 %v207
    %239 = vmatpush1.bf16.msra.mxu0 %v206
    %240 = vmatprep.subr.bf16.mxu0 %v209
    %241 = vmatpush1.bf16.msra.mxu0 %v208
    %242 = vmatprep.subr.bf16.mxu0 %v211
    %243 = vmatpush1.bf16.msra.mxu0 %v210
    %244 = vmatprep.subr.bf16.mxu0 %v213
    %245 = vmatpush1.bf16.msra.mxu0 %v212
    %246 = vmatprep.subr.bf16.mxu0 %v215
    %247 = vmatpush1.bf16.msra.mxu0 %v214
    %248 = vmatprep.subr.bf16.mxu0 0
    %249 = vmatpush1.bf16.msra.mxu0 0
    %250 = vmatprep.subr.bf16.mxu0 0
    %251 = vmatpush1.bf16.msra.mxu0 0
    %252 = vmatprep.subr.bf16.mxu0 0
    %253 = vmatpush1.bf16.msra.mxu0 0
    %254 = vmatprep.subr.bf16.mxu0 0
    %255 = vmatpush1.bf16.msra.mxu0 0
    %256 = vmatprep.subr.bf16.mxu0 0
    %257 = vmatpush1.bf16.msra.mxu0 0
    %258 = vmatprep.subr.bf16.mxu0 0
    %259 = vmatpush1.bf16.msra.mxu0 0
    %260 = vmatprep.subr.bf16.mxu0 0
    %261 = vmatpush1.bf16.msra.mxu0 0
    %262 = vmatprep.subr.bf16.mxu0 0
    %263 = vmatpush1.bf16.msra.mxu0 0
    %264 = vmatprep.mubr.bf16.mxu0 0
    %265 = vmatmul.mubr.bf16.gmra.mrb[0].mxu0 %v136
    %v266 = vpop.f32.mrb[0].mxu0
    %v267 = vadd.f32 %v97, %v266
    %v268 = vpop.f32.mrb[0].mxu0
    %v269 = vadd.f32 %v101, %v268
    %v270 = vpop.f32.mrb[0].mxu0
    %v271 = vadd.f32 %v97, %v270
    %v272 = vpop.f32.mrb[0].mxu0
    %v273 = vadd.f32 %v101, %v272
    %274 = vmatprep.mubr.bf16.mxu0 0
    %275 = vmatmul.mubr.bf16.gmra.mrb[0].mxu0 %v137
    %v276 = vpop.f32.mrb[0].mxu0
    %v277 = vadd.f32 %v97, %v276
    %v278 = vpop.f32.mrb[0].mxu0
    %v279 = vadd.f32 %v101, %v278
    %v280 = vpop.f32.mrb[0].mxu0
    %v281 = vadd.f32 %v97, %v280
    %v282 = vpop.f32.mrb[0].mxu0
    %v283 = vadd.f32 %v101, %v282
    %284 = vmatprep.mubr.bf16.mxu0 0
    %285 = vmatmul.mubr.bf16.gmra.mrb[0].mxu0 %v138
    %v286 = vpop.f32.mrb[0].mxu0
    %v287 = vadd.f32 %v97, %v286
    %v288 = vpop.f32.mrb[0].mxu0
    %v289 = vadd.f32 %v101, %v288
    %v290 = vpop.f32.mrb[0].mxu0
    %v291 = vadd.f32 %v97, %v290
    %v292 = vpop.f32.mrb[0].mxu0
    %v293 = vadd.f32 %v101, %v292
    %294 = vmatprep.mubr.bf16.mxu0 0
    %295 = vmatmul.mubr.bf16.gmra.mrb[0].mxu0 %v139
    %v296 = vpop.f32.mrb[0].mxu0
    %v297 = vadd.f32 %v97, %v296
    %v298 = vpop.f32.mrb[0].mxu0
    %v299 = vadd.f32 %v101, %v298
    %v300 = vpop.f32.mrb[0].mxu0
    %v301 = vadd.f32 %v97, %v300
    %v302 = vpop.f32.mrb[0].mxu0
    %v303 = vadd.f32 %v101, %v302
    %304 = vmatprep.mubr.bf16.mxu0 0
    %305 = vmatmul.mubr.bf16.gmra.mrb[0].mxu0 %v140
    %v306 = vpop.f32.mrb[0].mxu0
    %v307 = vadd.f32 %v97, %v306
    %v308 = vpop.f32.mrb[0].mxu0
    %v309 = vadd.f32 %v101, %v308
    %v310 = vpop.f32.mrb[0].mxu0
    %v311 = vadd.f32 %v97, %v310
    %v312 = vpop.f32.mrb[0].mxu0
    %v313 = vadd.f32 %v101, %v312
    %314 = vmatprep.mubr.bf16.mxu0 0
    %315 = vmatmul.mubr.bf16.gmra.mrb[0].mxu0 %v141
    %v316 = vpop.f32.mrb[0].mxu0
    %v317 = vadd.f32 %v97, %v316
    %v318 = vpop.f32.mrb[0].mxu0
    %v319 = vadd.f32 %v101, %v318
    %v320 = vpop.f32.mrb[0].mxu0
    %v321 = vadd.f32 %v97, %v320
    %v322 = vpop.f32.mrb[0].mxu0
    %v323 = vadd.f32 %v101, %v322
    %324 = vmatprep.mubr.bf16.mxu0 0
    %325 = vmatmul.mubr.bf16.gmra.mrb[0].mxu0 %v142
    %v326 = vpop.f32.mrb[0].mxu0
    %v327 = vadd.f32 %v97, %v326
    %v328 = vpop.f32.mrb[0].mxu0
    %v329 = vadd.f32 %v101, %v328
    %v330 = vpop.f32.mrb[0].mxu0
    %v331 = vadd.f32 %v97, %v330
    %v332 = vpop.f32.mrb[0].mxu0
    %v333 = vadd.f32 %v101, %v332
    %334 = vmatprep.mubr.bf16.mxu0 0
    %335 = vmatmul.mubr.bf16.gmra.mrb[0].mxu0 %v143
    %v336 = vpop.f32.mrb[0].mxu0
    %v337 = vadd.f32 %v97, %v336
    %v338 = vpop.f32.mrb[0].mxu0
    %v339 = vadd.f32 %v101, %v338
    %v340 = vpop.f32.mrb[0].mxu0
    %v341 = vadd.f32 %v97, %v340
    %v342 = vpop.f32.mrb[0].mxu0
    %v343 = vadd.f32 %v101, %v342
    %344 = vdwg.mxu0
    %v345 = vmax.f32 %v267, 0.0
    %v346 = vmax.f32 %v269, 0.0
    %v347 = vmax.f32 %v271, 0.0
    %v348 = vmax.f32 %v273, 0.0
    %v349 = vmax.f32 %v277, 0.0
    %v350 = vmax.f32 %v279, 0.0
    %v351 = vmax.f32 %v281, 0.0
    %v352 = vmax.f32 %v283, 0.0
    %v353 = vmax.f32 %v287, 0.0
    %v354 = vmax.f32 %v289, 0.0
    %v355 = vmax.f32 %v291, 0.0
    %v356 = vmax.f32 %v293, 0.0
    %v357 = vmax.f32 %v297, 0.0
    %v358 = vmax.f32 %v299, 0.0
    %v359 = vmax.f32 %v301, 0.0
    %v360 = vmax.f32 %v303, 0.0
    %v361 = vmax.f32 %v307, 0.0
    %v362 = vmax.f32 %v309, 0.0
    %v363 = vmax.f32 %v311, 0.0
    %v364 = vmax.f32 %v313, 0.0
    %v365 = vmax.f32 %v317, 0.0
    %v366 = vmax.f32 %v319, 0.0
    %v367 = vmax.f32 %v321, 0.0
    %v368 = vmax.f32 %v323, 0.0
    %v369 = vmax.f32 %v327, 0.0
    %v370 = vmax.f32 %v329, 0.0
    %v371 = vmax.f32 %v331, 0.0
    %v372 = vmax.f32 %v333, 0.0
    %v373 = vmax.f32 %v337, 0.0
    %v374 = vmax.f32 %v339, 0.0
    %v375 = vmax.f32 %v341, 0.0
    %v376 = vmax.f32 %v343, 0.0
    %v377 = vpack.c.bf16 %v347, %v345
    %v378 = vpack.c.bf16 %v348, %v346
    %v379 = vpack.c.bf16 %v351, %v349
    %v380 = vpack.c.bf16 %v352, %v350
    %v381 = vpack.c.bf16 %v355, %v353
    %v382 = vpack.c.bf16 %v356, %v354
    %v383 = vpack.c.bf16 %v359, %v357
    %v384 = vpack.c.bf16 %v360, %v358
    %v385 = vpack.c.bf16 %v363, %v361
    %v386 = vpack.c.bf16 %v364, %v362
    %v387 = vpack.c.bf16 %v367, %v365
    %v388 = vpack.c.bf16 %v368, %v366
    %v389 = vpack.c.bf16 %v371, %v369
    %v390 = vpack.c.bf16 %v372, %v370
    %v391 = vpack.c.bf16 %v375, %v373
    %v392 = vpack.c.bf16 %v376, %v374
    %v393 = vld [vmem:[#allocation7] sm:$0xf]
    %v394 = vld [vmem:[#allocation7 + $0x4] sm:$0xf]
    %v395 = vld [vmem:[#allocation7 + $0x8] sm:$0xf]
    %v396 = vld [vmem:[#allocation7 + $0xc] sm:$0xf]
    %v397 = vld [vmem:[#allocation7 + $0x10] sm:$0xf]
    %v398 = vld [vmem:[#allocation7 + $0x14] sm:$0xf]
    %v399 = vld [vmem:[#allocation7 + $0x18] sm:$0xf]
    %v400 = vld [vmem:[#allocation7 + $0x1c] sm:$0xf]
    %v401 = vld [vmem:[#allocation7 + $0x20] sm:$0xf]
    %v402 = vld [vmem:[#allocation7 + $0x24] sm:$0xf]
    %v403 = vld [vmem:[#allocation7 + $0x28] sm:$0xf]
    %v404 = vld [vmem:[#allocation7 + $0x2c] sm:$0xf]
    %v405 = vld [vmem:[#allocation7 + $0x30] sm:$0xf]
    %v406 = vld [vmem:[#allocation7 + $0x34] sm:$0xf]
    %v407 = vld [vmem:[#allocation7 + $0x38] sm:$0xf]
    %v408 = vld [vmem:[#allocation7 + $0x3c] sm:$0xf]
    %v409 = vld [vmem:[#allocation7 + $0x40] sm:$0xf]
    %v410 = vld [vmem:[#allocation7 + $0x44] sm:$0xf]
    %v411 = vld [vmem:[#allocation7 + $0x48] sm:$0xf]
    %v412 = vld [vmem:[#allocation7 + $0x4c] sm:$0xf]
    %v413 = vld [vmem:[#allocation7 + $0x50] sm:$0xf]
    %v414 = vld [vmem:[#allocation7 + $0x54] sm:$0xf]
    %v415 = vld [vmem:[#allocation7 + $0x58] sm:$0xf]
    %v416 = vld [vmem:[#allocation7 + $0x5c] sm:$0xf]
    %v417 = vld [vmem:[#allocation7 + $0x60] sm:$0xf]
    %v418 = vld [vmem:[#allocation7 + $0x64] sm:$0xf]
    %v419 = vld [vmem:[#allocation7 + $0x68] sm:$0xf]
    %v420 = vld [vmem:[#allocation7 + $0x6c] sm:$0xf]
    %v421 = vld [vmem:[#allocation7 + $0x70] sm:$0xf]
    %v422 = vld [vmem:[#allocation7 + $0x74] sm:$0xf]
    %v423 = vld [vmem:[#allocation7 + $0x78] sm:$0xf]
    %v424 = vld [vmem:[#allocation7 + $0x7c] sm:$0xf]
    %v457 = vunpack.c.l.b16 %v393
    %v458 = vunpack.c.l.b16 %v394
    %v459 = vunpack.c.l.b16 %v395
    %v460 = vunpack.c.l.b16 %v396
    %v461 = vunpack.c.l.b16 %v397
    %v462 = vunpack.c.l.b16 %v398
    %v463 = vunpack.c.l.b16 %v399
    %v464 = vunpack.c.l.b16 %v400
    %v465 = vunpack.c.l.b16 %v401
    %v466 = vunpack.c.l.b16 %v402
    %v467 = vunpack.c.l.b16 %v403
    %v468 = vunpack.c.l.b16 %v404
    %v469 = vunpack.c.l.b16 %v405
    %v470 = vunpack.c.l.b16 %v406
    %v471 = vunpack.c.l.b16 %v407
    %v472 = vunpack.c.l.b16 %v408
    %v473 = vunpack.c.l.b16 %v409
    %v474 = vunpack.c.l.b16 %v410
    %v475 = vunpack.c.l.b16 %v411
    %v476 = vunpack.c.l.b16 %v412
    %v477 = vunpack.c.l.b16 %v413
    %v478 = vunpack.c.l.b16 %v414
    %v479 = vunpack.c.l.b16 %v415
    %v480 = vunpack.c.l.b16 %v416
    %v481 = vunpack.c.l.b16 %v417
    %v482 = vunpack.c.l.b16 %v418
    %v483 = vunpack.c.l.b16 %v419
    %v484 = vunpack.c.l.b16 %v420
    %v485 = vunpack.c.l.b16 %v421
    %v486 = vunpack.c.l.b16 %v422
    %v487 = vunpack.c.l.b16 %v423
    %v488 = vunpack.c.l.b16 %v424
    %v489 = vpack.c.b16 %v458, %v457
    %v490 = vpack.c.b16 %v460, %v459
    %v491 = vpack.c.b16 %v462, %v461
    %v492 = vpack.c.b16 %v464, %v463
    %v493 = vpack.c.b16 %v466, %v465
    %v494 = vpack.c.b16 %v468, %v467
    %v495 = vpack.c.b16 %v470, %v469
    %v496 = vpack.c.b16 %v472, %v471
    %v497 = vpack.c.b16 %v474, %v473
    %v498 = vpack.c.b16 %v476, %v475
    %v499 = vpack.c.b16 %v478, %v477
    %v500 = vpack.c.b16 %v480, %v479
    %v501 = vpack.c.b16 %v482, %v481
    %v502 = vpack.c.b16 %v484, %v483
    %v503 = vpack.c.b16 %v486, %v485
    %v504 = vpack.c.b16 %v488, %v487
    %521 = vmatprep.subr.bf16.mxu0 0
    %522 = vmatpush1.bf16.msra.mxu0 %v489
    %523 = vmatprep.subr.bf16.mxu0 0
    %524 = vmatpush1.bf16.msra.mxu0 %v490
    %525 = vmatprep.subr.bf16.mxu0 0
    %526 = vmatpush1.bf16.msra.mxu0 %v491
    %527 = vmatprep.subr.bf16.mxu0 0
    %528 = vmatpush1.bf16.msra.mxu0 %v492
    %529 = vmatprep.subr.bf16.mxu0 0
    %530 = vmatpush1.bf16.msra.mxu0 %v493
    %531 = vmatprep.subr.bf16.mxu0 0
    %532 = vmatpush1.bf16.msra.mxu0 %v494
    %533 = vmatprep.subr.bf16.mxu0 0
    %534 = vmatpush1.bf16.msra.mxu0 %v495
    %535 = vmatprep.subr.bf16.mxu0 0
    %536 = vmatpush1.bf16.msra.mxu0 %v496
    %537 = vmatprep.subr.bf16.mxu0 0
    %538 = vmatpush1.bf16.msra.mxu0 %v497
    %539 = vmatprep.subr.bf16.mxu0 0
    %540 = vmatpush1.bf16.msra.mxu0 %v498
    %541 = vmatprep.subr.bf16.mxu0 0
    %542 = vmatpush1.bf16.msra.mxu0 %v499
    %543 = vmatprep.subr.bf16.mxu0 0
    %544 = vmatpush1.bf16.msra.mxu0 %v500
    %545 = vmatprep.subr.bf16.mxu0 0
    %546 = vmatpush1.bf16.msra.mxu0 %v501
    %547 = vmatprep.subr.bf16.mxu0 0
    %548 = vmatpush1.bf16.msra.mxu0 %v502
    %549 = vmatprep.subr.bf16.mxu0 0
    %550 = vmatpush1.bf16.msra.mxu0 %v503
    %551 = vmatprep.subr.bf16.mxu0 0
    %552 = vmatpush1.bf16.msra.mxu0 %v504
    %553 = vmatprep.mubr.bf16.mxu0 %v378
    %554 = vmatmul.mubr.bf16.gmra.mrb[0].mxu0 %v377
    %v555 = vpop.f32.mrb[0].mxu0
    %v556 = vadd.f32 0.0, %v555
    %v557 = vpop.f32.mrb[0].mxu0
    %v558 = vpop.f32.mrb[0].mxu0
    %v559 = vadd.f32 0.0, %v558
    %v560 = vpop.f32.mrb[0].mxu0
    %561 = vmatprep.mubr.bf16.mxu0 %v380
    %562 = vmatmul.mubr.bf16.gmra.mrb[0].mxu0 %v379
    %v563 = vpop.f32.mrb[0].mxu0
    %v564 = vadd.f32 0.0, %v563
    %v565 = vpop.f32.mrb[0].mxu0
    %v566 = vpop.f32.mrb[0].mxu0
    %v567 = vadd.f32 0.0, %v566
    %v568 = vpop.f32.mrb[0].mxu0
    %569 = vmatprep.mubr.bf16.mxu0 %v382
    %570 = vmatmul.mubr.bf16.gmra.mrb[0].mxu0 %v381
    %v571 = vpop.f32.mrb[0].mxu0
    %v572 = vadd.f32 0.0, %v571
    %v573 = vpop.f32.mrb[0].mxu0
    %v574 = vpop.f32.mrb[0].mxu0
    %v575 = vadd.f32 0.0, %v574
    %v576 = vpop.f32.mrb[0].mxu0
    %577 = vmatprep.mubr.bf16.mxu0 %v384
    %578 = vmatmul.mubr.bf16.gmra.mrb[0].mxu0 %v383
    %v579 = vpop.f32.mrb[0].mxu0
    %v580 = vadd.f32 0.0, %v579
    %v581 = vpop.f32.mrb[0].mxu0
    %v582 = vpop.f32.mrb[0].mxu0
    %v583 = vadd.f32 0.0, %v582
    %v584 = vpop.f32.mrb[0].mxu0
    %585 = vmatprep.mubr.bf16.mxu0 %v386
    %586 = vmatmul.mubr.bf16.gmra.mrb[0].mxu0 %v385
    %v587 = vpop.f32.mrb[0].mxu0
    %v588 = vadd.f32 0.0, %v587
    %v589 = vpop.f32.mrb[0].mxu0
    %v590 = vpop.f32.mrb[0].mxu0
    %v591 = vadd.f32 0.0, %v590
    %v592 = vpop.f32.mrb[0].mxu0
    %593 = vmatprep.mubr.bf16.mxu0 %v388
    %594 = vmatmul.mubr.bf16.gmra.mrb[0].mxu0 %v387
    %v595 = vpop.f32.mrb[0].mxu0
    %v596 = vadd.f32 0.0, %v595
    %v597 = vpop.f32.mrb[0].mxu0
    %v598 = vpop.f32.mrb[0].mxu0
    %v599 = vadd.f32 0.0, %v598
    %v600 = vpop.f32.mrb[0].mxu0
    %601 = vmatprep.mubr.bf16.mxu0 %v390
    %602 = vmatmul.mubr.bf16.gmra.mrb[0].mxu0 %v389
    %v603 = vpop.f32.mrb[0].mxu0
    %v604 = vadd.f32 0.0, %v603
    %v605 = vpop.f32.mrb[0].mxu0
    %v606 = vpop.f32.mrb[0].mxu0
    %v607 = vadd.f32 0.0, %v606
    %v608 = vpop.f32.mrb[0].mxu0
    %609 = vmatprep.mubr.bf16.mxu0 %v392
    %610 = vmatmul.mubr.bf16.gmra.mrb[0].mxu0 %v391
    %v611 = vpop.f32.mrb[0].mxu0
    %v612 = vadd.f32 0.0, %v611
    %v613 = vpop.f32.mrb[0].mxu0
    %v614 = vpop.f32.mrb[0].mxu0
    %v615 = vadd.f32 0.0, %v614
    %v616 = vpop.f32.mrb[0].mxu0
    %617 = vdwg.mxu0
    %v618 = vpack.c.bf16 %v559, %v556
    %v619 = vpack.c.bf16 %v567, %v564
    %v620 = vpack.c.bf16 %v575, %v572
    %v621 = vpack.c.bf16 %v583, %v580
    %v622 = vpack.c.bf16 %v591, %v588
    %v623 = vpack.c.bf16 %v599, %v596
    %v624 = vpack.c.bf16 %v607, %v604
    %v625 = vpack.c.bf16 %v615, %v612
    %v634 = vunpack.c.l.b16 %v618
    %v635 = vunpack.c.h.b16 %v618
    %v636 = vunpack.c.l.b16 %v619
    %v637 = vunpack.c.h.b16 %v619
    %v638 = vunpack.c.l.b16 %v620
    %v639 = vunpack.c.h.b16 %v620
    %v640 = vunpack.c.l.b16 %v621
    %v641 = vunpack.c.h.b16 %v621
    %v642 = vunpack.c.l.b16 %v622
    %v643 = vunpack.c.h.b16 %v622
    %v644 = vunpack.c.l.b16 %v623
    %v645 = vunpack.c.h.b16 %v623
    %v646 = vunpack.c.l.b16 %v624
    %v647 = vunpack.c.h.b16 %v624
    %v648 = vunpack.c.l.b16 %v625
    %v649 = vunpack.c.h.b16 %v625
    %v650 = vpack.c.b16 %v634, %v634
    %v651 = vpack.c.b16 %v635, %v635
    %v652 = vpack.c.b16 %v636, %v636
    %v653 = vpack.c.b16 %v637, %v637
    %v654 = vpack.c.b16 %v638, %v638
    %v655 = vpack.c.b16 %v639, %v639
    %v656 = vpack.c.b16 %v640, %v640
    %v657 = vpack.c.b16 %v641, %v641
    %v658 = vpack.c.b16 %v642, %v642
    %v659 = vpack.c.b16 %v643, %v643
    %v660 = vpack.c.b16 %v644, %v644
    %v661 = vpack.c.b16 %v645, %v645
    %v662 = vpack.c.b16 %v646, %v646
    %v663 = vpack.c.b16 %v647, %v647
    %v664 = vpack.c.b16 %v648, %v648
    %v665 = vpack.c.b16 %v649, %v649
    %682 = vst [vmem:[#allocation8] sm:$0xf] %v650
    %683 = vst [vmem:[#allocation8 + $0x4] sm:$0xf] %v651
    %684 = vst [vmem:[#allocation8 + $0x8] sm:$0xf] %v652
    %685 = vst [vmem:[#allocation8 + $0xc] sm:$0xf] %v653
    %686 = vst [vmem:[#allocation8 + $0x10] sm:$0xf] %v654
    %687 = vst [vmem:[#allocation8 + $0x14] sm:$0xf] %v655
    %688 = vst [vmem:[#allocation8 + $0x18] sm:$0xf] %v656
    %689 = vst [vmem:[#allocation8 + $0x1c] sm:$0xf] %v657
    %690 = vst [vmem:[#allocation8 + $0x20] sm:$0xf] %v658
    %691 = vst [vmem:[#allocation8 + $0x24] sm:$0xf] %v659
    %692 = vst [vmem:[#allocation8 + $0x28] sm:$0xf] %v660
    %693 = vst [vmem:[#allocation8 + $0x2c] sm:$0xf] %v661
    %694 = vst [vmem:[#allocation8 + $0x30] sm:$0xf] %v662
    %695 = vst [vmem:[#allocation8 + $0x34] sm:$0xf] %v663
    %696 = vst [vmem:[#allocation8 + $0x38] sm:$0xf] %v664
    %697 = vst [vmem:[#allocation8 + $0x3c] sm:$0xf] %v665
    // Predicated region
    $region30: #{tpu_custom_call.1} parent=1 // pred_check
      _
    $region31: #{tpu_custom_call.1} parent=1 // pred_check_branch
      %699 = sbr.rel (0) target = $region33
    $region32: #{tpu_custom_call.1} parent=1 // pred_region
      %s701 = ssub.s32 1024, 1024
      %702 = vsyncadd [#allocation4], %s701
      %s703 = sshll.u32 [#allocation8], 4
      %s704 = int_to_ptr.vmem [resolvable:$true] %s703
      %709 = dma.vmem_to_hbm [thread:$0]  %s704, 1024, %s4, [#allocation4], 64, 64, 4
    $region33: #{tpu_custom_call.1} parent=1 // pred_fallthru
      _
    // Predicated region
    $region34: #{tpu_custom_call.1} parent=1 // pred_check
      _
    $region35: #{tpu_custom_call.1} parent=1 // pred_check_branch
      %711 = sbr.rel (0) target = $region37
    $region36: #{tpu_custom_call.1} parent=1 // pred_region
      %712 = dma.done [#allocation4], 1024
    $region37: #{tpu_custom_call.1} parent=1 // pred_fallthru
      _
    %713 = vsyncpa [#allocation3], 1
    %714 = vsyncpa [#allocation6], 1
    %715 = vsyncpa [#allocation4], 1

</llo_original>
